<compile_context>
chip_gen: v7x
topology: tpu7x:2x2x1
jax: 0.10.0
libtpu: 0.0.40
codegen_flags: <defaults>
</compile_context>

<pallas_src>
import jax
import jax.numpy as jnp
from jax.experimental import pallas as pl
from jax.experimental.pallas import tpu as pltpu


def _round_up(x, mult):
    return ((x + mult - 1) // mult) * mult


def _lowrank_kernel(w_ref, b_ref, x_ref, u_ref, o_ref):
    # out_tile = W @ X_tile + B @ U_tile, f32 accumulation on the MXU.
    acc = jnp.dot(w_ref[...], x_ref[...], preferred_element_type=jnp.float32)
    acc = acc + jnp.dot(b_ref[...], u_ref[...], preferred_element_type=jnp.float32)
    o_ref[...] = acc.astype(o_ref.dtype)


def _tpu_topology():
    """(vmem_capacity_bytes, multi_tensorcore) with conservative fallbacks."""
    vmem_bytes = 64 << 20          # conservative fallback: v7x per-TC VMEM
    multi_tc = False
    try:
        info = pltpu.get_tpu_info()
        vmem_bytes = int(getattr(info, "vmem_capacity_bytes", vmem_bytes))
    except Exception:
        pass
    try:
        kind = jax.devices()[0].device_kind.lower()
        multi_tc = "v7" in kind    # v7x: 2 TensorCores share the grid via "parallel"
    except Exception:
        pass
    return vmem_bytes, multi_tc


def _pick_tile(m, per_col_bytes, fixed_bytes, requested_tm, multi_tc, vmem_bytes):
    """Choose the sample-axis tile width (multiple of 128) and grid length."""
    m_ceil = _round_up(m, 128)
    # VMEM budget with headroom: cap at ~38 MiB so even after the 1.5x safety
    # factor the requested limit stays under v7x's 64 MiB per-TC VMEM.
    budget = min(int(0.55 * vmem_bytes), 38 << 20) - fixed_bytes
    budget = max(budget, per_col_bytes * 128)
    vmem_cap_cols = max(128, (budget // per_col_bytes) // 128 * 128)

    tm = max(128, min(m_ceil, (requested_tm // 128) * 128, vmem_cap_cols))
    grid_len = pl.cdiv(m, tm)

    if multi_tc:
        # Megacore: give both TensorCores work, and avoid tiny odd grids
        # (e.g. grid_len=3 -> 2/1 split leaves one TC idle a third of the time).
        if grid_len < 2 and m > 128:
            tm = max(128, _round_up(pl.cdiv(m, 2), 128))
        elif 2 < grid_len < 8 and grid_len % 2 == 1:
            tm = max(128, _round_up(pl.cdiv(m, grid_len + 1), 128))
        grid_len = pl.cdiv(m, tm)
    # Single-TC chips (v5e/v6e): keep the single biggest tile; forcing a split
    # only adds another 0.35 us step.
    return tm, grid_len


def lowrank_forward(L, R, B, X, U, *, tm=16384, out_dtype=None):
    """Compute L @ (R.T @ X) + B @ U with a Pallas TPU kernel.

    tm        : max sample-axis tile width (multiple of 128); the effective tile
                is additionally capped by the chip's VMEM budget.
    out_dtype : dtype of the result written to HBM (cast happens in-kernel);
                defaults to X.dtype. Use jnp.bfloat16 to halve the output write.
    """
    n, rank = L.shape
    p = B.shape[1]
    m = X.shape[1]
    assert R.shape == (n, rank)
    assert B.shape == (n, p)
    assert X.shape == (n, m)
    assert U.shape == (p, m)

    if out_dtype is None:
        out_dtype = X.dtype

    # Pre-fuse the low-rank product: W = L @ R.T (n x n). Extra n^2 vs 2*n*rank
    # FLOPs per column are free on a bandwidth-bound kernel; the kernel body
    # loses the per-step transpose and one matmul chain.
    W = jnp.dot(L, R.T, preferred_element_type=jnp.float32).astype(X.dtype)
    Bc = B.astype(X.dtype)   # tiny param; match X's dtype for the MXU

    x_item = jnp.dtype(X.dtype).itemsize
    u_item = jnp.dtype(U.dtype).itemsize
    o_item = jnp.dtype(out_dtype).itemsize

    # Per-column VMEM bytes: double-buffered X / U / out tiles plus the two
    # (n, tm) f32 matmul temporaries inside the kernel body.
    per_col = 2 * (n * x_item + p * u_item + n * o_item) + 2 * n * 4
    # Resident params (count double-buffered to be safe).
    fixed = 2 * (n * n * x_item + n * p * x_item)

    vmem_bytes, multi_tc = _tpu_topology()
    tm_eff, grid_len = _pick_tile(m, per_col, fixed, tm, multi_tc, vmem_bytes)

    total_bytes = per_col * tm_eff + fixed
    vmem_limit = min(
        max(32 << 20, int(1.5 * total_bytes) + (4 << 20)),
        max(32 << 20, int(0.95 * vmem_bytes)),
    )

    out = pl.pallas_call(
        _lowrank_kernel,
        out_shape=jax.ShapeDtypeStruct((n, m), out_dtype),
        grid_spec=pltpu.PrefetchScalarGridSpec(
            num_scalar_prefetch=0,
            grid=(grid_len,),
            in_specs=[
                # Parameters: full-array blocks, constant index_map -> resident.
                pl.BlockSpec((n, n), lambda j: (0, 0)),        # W = L @ R.T
                pl.BlockSpec((n, p), lambda j: (0, 0)),        # B
                # Data: large lane-dense tiles along the sample axis (ragged
                # last block handled by Pallas with masked load/store).
                pl.BlockSpec((n, tm_eff), lambda j: (0, j)),   # X
                pl.BlockSpec((p, tm_eff), lambda j: (0, j)),   # U
            ],
            out_specs=pl.BlockSpec((n, tm_eff), lambda j: (0, j)),
        ),
        compiler_params=pltpu.CompilerParams(
            dimension_semantics=("parallel",),
            vmem_limit_bytes=vmem_limit,
        ),
    )(W, Bc, X, U)
    return out


if __name__ == "__main__":
    # Small shapes consistent with the module: n = state dim, p = input dim,
    # rank = low-rank factor dim, m = number of samples (columns).
    # m is deliberately NOT a multiple of 128 to exercise the ragged tail path.
    n, p, rank, m = 32, 16, 8, 700
    dtype = jnp.float32

    key = jax.random.PRNGKey(0)
    kL, kR, kB, kX, kU = jax.random.split(key, 5)

    # Deterministic stand-ins for torch.randn parameter init.
    L = jax.random.normal(kL, (n, rank), dtype=dtype)
    R = jax.random.normal(kR, (n, rank), dtype=dtype)
    B = jax.random.normal(kB, (n, p), dtype=dtype)

    X = jax.random.normal(kX, (n, m), dtype=dtype)
    U = jax.random.normal(kU, (p, m), dtype=dtype)

    ref = L @ (R.T @ X) + B @ U

    # f32 path: tight tolerance (W pre-fusion only reorders f32 accumulation).
    out = lowrank_forward(L, R, B, X, U)
    out = jax.block_until_ready(out)
    assert out.shape == (n, m)
    assert out.dtype == dtype
    assert jnp.allclose(out, ref, atol=1e-3, rtol=1e-3), "f32 mismatch vs reference"

    # bf16 OUTPUT path: inputs stream at f32, only the (n, m) write is halved.
    out_bf16 = lowrank_forward(L, R, B, X, U, out_dtype=jnp.bfloat16)
    out_bf16 = jax.block_until_ready(out_bf16)
    assert out_bf16.shape == (n, m)
    assert out_bf16.dtype == jnp.bfloat16
    max_err = jnp.max(jnp.abs(out_bf16.astype(jnp.float32) - ref))
    scale = jnp.max(jnp.abs(ref))
    assert max_err <= 2e-2 * scale, "bf16-output mismatch vs reference"

    # TODO(synk): project_LR / project_w (l1-ball projection) is a training-time
    # numpy routine with data-dependent sorting loops, not part of the forward pass.
    print("KERNEL_OK")
</pallas_src>

<mosaic_0001>
module attributes {stable_mosaic.version = 11 : i64} {
  func.func @_lowrank_kernel(%arg0: i32, %arg1: memref<32x32xf32, #tpu.memory_space<vmem>>, %arg2: memref<32x16xf32, #tpu.memory_space<vmem>>, %arg3: memref<32x768xf32, #tpu.memory_space<vmem>>, %arg4: memref<16x768xf32, #tpu.memory_space<vmem>>, %arg5: memref<32x768xf32, #tpu.memory_space<vmem>>) attributes {dimension_semantics = [#tpu.dimension_semantics<parallel>], iteration_bounds = array<i64: 1>, scalar_prefetch = 0 : i64, scratch_operands = 0 : i64, tpu.core_type = #tpu.core_type<tc>, window_params = [{pipeline_mode = #tpu.pipeline_mode<synchronous>, transform_indices = @transform_0, window_bounds = array<i64: 32, 32>}, {pipeline_mode = #tpu.pipeline_mode<synchronous>, transform_indices = @transform_1, window_bounds = array<i64: 32, 16>}, {transform_indices = @transform_2, window_bounds = array<i64: 32, 768>}, {transform_indices = @transform_3, window_bounds = array<i64: 16, 768>}, {transform_indices = @transform_4, window_bounds = array<i64: 32, 768>}]} {
    %c0 = arith.constant 0 : index
    %c0_0 = arith.constant 0 : index
    %0 = vector.load %arg1[%c0, %c0_0] : memref<32x32xf32, #tpu.memory_space<vmem>>, vector<32x32xf32>
    %c0_1 = arith.constant 0 : index
    %c0_2 = arith.constant 0 : index
    %1 = vector.load %arg3[%c0_1, %c0_2] : memref<32x768xf32, #tpu.memory_space<vmem>>, vector<32x768xf32>
    %cst = arith.constant dense<0.000000e+00> : vector<32x768xf32>
    %2 = tpu.matmul %0, %1, %cst {dimension_numbers = #tpu.dot_dimension_numbers<[1], [0], [0], [1], [0, 0, 1, 1], [], []>} : vector<32x32xf32>, vector<32x768xf32>, vector<32x768xf32> -> vector<32x768xf32>
    %c0_3 = arith.constant 0 : index
    %c0_4 = arith.constant 0 : index
    %3 = vector.load %arg2[%c0_3, %c0_4] : memref<32x16xf32, #tpu.memory_space<vmem>>, vector<32x16xf32>
    %c0_5 = arith.constant 0 : index
    %c0_6 = arith.constant 0 : index
    %4 = vector.load %arg4[%c0_5, %c0_6] : memref<16x768xf32, #tpu.memory_space<vmem>>, vector<16x768xf32>
    %cst_7 = arith.constant dense<0.000000e+00> : vector<32x768xf32>
    %5 = tpu.matmul %3, %4, %cst_7 {dimension_numbers = #tpu.dot_dimension_numbers<[1], [0], [0], [1], [0, 0, 1, 1], [], []>} : vector<32x16xf32>, vector<16x768xf32>, vector<32x768xf32> -> vector<32x768xf32>
    %6 = arith.addf %2, %5 : vector<32x768xf32>
    %c0_8 = arith.constant 0 : index
    %c0_9 = arith.constant 0 : index
    %7 = vector.load %arg5[%c0_8, %c0_9] : memref<32x768xf32, #tpu.memory_space<vmem>>, vector<32x768xf32>
    tpu.vector_store %arg5[%c0_8, %c0_9], %6 {strides = array<i32>} : memref<32x768xf32, #tpu.memory_space<vmem>>, vector<32x768xf32>,
    return
  }
  func.func @transform_0(%arg0: i32) -> (i32, i32) {
    %c0_i32 = arith.constant 0 : i32
    %c0_i32_0 = arith.constant 0 : i32
    %c0_i32_1 = arith.constant 0 : i32
    return %c0_i32, %c0_i32_0 : i32, i32
  }
  func.func @transform_1(%arg0: i32) -> (i32, i32) {
    %c0_i32 = arith.constant 0 : i32
    %c0_i32_0 = arith.constant 0 : i32
    %c0_i32_1 = arith.constant 0 : i32
    return %c0_i32, %c0_i32_0 : i32, i32
  }
  func.func @transform_2(%arg0: i32) -> (i32, i32) {
    %c0_i32 = arith.constant 0 : i32
    %c0_i32_0 = arith.constant 0 : i32
    return %c0_i32, %arg0 : i32, i32
  }
  func.func @transform_3(%arg0: i32) -> (i32, i32) {
    %c0_i32 = arith.constant 0 : i32
    %c0_i32_0 = arith.constant 0 : i32
    return %c0_i32, %arg0 : i32, i32
  }
  func.func @transform_4(%arg0: i32) -> (i32, i32) {
    %c0_i32 = arith.constant 0 : i32
    %c0_i32_0 = arith.constant 0 : i32
    return %c0_i32, %arg0 : i32, i32
  }
}

</mosaic_0001>

<llo_original>
// kernel: tpu_custom_call.1
$region0: #{tpu_custom_call.1}
  #allocation0 [shape = 'u32[]', space=smem, size = 0x4, offset = 0x4, fixed_abs, tag = 'smem constant byte address 0x4 - core index']
  #allocation1 [shape = 'u32[144,128]{1,0:T(1,128)}', space=vmem, size = 0x12000, scoped, tag = 'internal scratch']
  %s0 = inlined_call_operand.vmem [shape: f32[32,32], index: 0, kind: input, shape index: {}]
  %s1 = inlined_call_operand.vmem [shape: f32[32,16], index: 1, kind: input, shape index: {}]
  %s2 = inlined_call_operand.hbm [shape: f32[32,700], index: 2, kind: input, shape index: {}]
  %s3 = inlined_call_operand.hbm [shape: f32[16,700], index: 3, kind: input, shape index: {}]
  %s4 = inlined_call_operand.hbm [shape: f32[32,700], index: 4, kind: output, shape index: {}]
  %s5 = sld [smem:[#allocation0]]
  $region34: #{tpu_custom_call.1} parent=0
    _
  %s7 = ssub.s32 1, %s5
  %s8 = scalar_select 0, %s7, %s5
  $region1: #{tpu_custom_call.1} parent=0
    #allocation2 [shape = 'u8[98304]{0}', space=vmem, size = 0x18000, scoped, tag = 'input window, operand 2, single buffered']
    #allocation3 [shape = 's32[1]{0}', space=sflag, size = 0x4, scoped, tag = 'scoped memory for tpu_custom_call.1']
    #allocation4 [shape = 's32[1]{0}', space=sflag, size = 0x4, scoped, tag = 'scoped memory for tpu_custom_call.1']
    #allocation5 [shape = 'u8[49152]{0}', space=vmem, size = 0xc000, scoped, tag = 'input window, operand 3, single buffered']
    #allocation6 [shape = 's32[1]{0}', space=sflag, size = 0x4, scoped, tag = 'scoped memory for tpu_custom_call.1']
    #allocation7 [shape = 'u8[98304]{0}', space=vmem, size = 0x18000, scoped, tag = 'output window, operand 0, single buffered']
    %9 = vsyncpa [#allocation3], 0
    %10 = vsyncpa [#allocation6], 0
    %11 = vsyncpa [#allocation4], 0
    // Predicated region
    $region2: #{tpu_custom_call.1} parent=1 // pred_check
      _
    $region3: #{tpu_custom_call.1} parent=1 // pred_check_branch
      %13 = sbr.rel (0) target = $region5
    $region4: #{tpu_custom_call.1} parent=1 // pred_region
      _
    $region5: #{tpu_custom_call.1} parent=1 // pred_fallthru
      _
    // Predicated region
    $region6: #{tpu_custom_call.1} parent=1 // pred_check
      _
    $region7: #{tpu_custom_call.1} parent=1 // pred_check_branch
      %15 = sbr.rel (0) target = $region9
    $region8: #{tpu_custom_call.1} parent=1 // pred_region
      _
    $region9: #{tpu_custom_call.1} parent=1 // pred_fallthru
      _
    // Predicated region
    $region10: #{tpu_custom_call.1} parent=1 // pred_check
      _
    $region11: #{tpu_custom_call.1} parent=1 // pred_check_branch
      %17 = sbr.rel (0) target = $region13
    $region12: #{tpu_custom_call.1} parent=1 // pred_region
      %s19 = ssub.s32 3072, 3072
      %20 = vsyncadd [#allocation3], %s19
      %s21 = sshll.u32 [#allocation2], 4
      %s22 = int_to_ptr.vmem [resolvable:$true] %s21
      %27 = dma.hbm_to_vmem [thread:$0]  %s2, 3072, %s22, [#allocation3], 768, 768, 48
    $region13: #{tpu_custom_call.1} parent=1 // pred_fallthru
      _
    // Predicated region
    $region14: #{tpu_custom_call.1} parent=1 // pred_check
      _
    $region15: #{tpu_custom_call.1} parent=1 // pred_check_branch
      %29 = sbr.rel (0) target = $region17
    $region16: #{tpu_custom_call.1} parent=1 // pred_region
      %s31 = ssub.s32 1536, 1536
      %32 = vsyncadd [#allocation6], %s31
      %s33 = sshll.u32 [#allocation5], 4
      %s34 = int_to_ptr.vmem [resolvable:$true] %s33
      %39 = dma.hbm_to_vmem [thread:$0]  %s3, 1536, %s34, [#allocation6], 768, 768, 48
    $region17: #{tpu_custom_call.1} parent=1 // pred_fallthru
      _
    // Predicated region
    $region18: #{tpu_custom_call.1} parent=1 // pred_check
      _
    $region19: #{tpu_custom_call.1} parent=1 // pred_check_branch
      %41 = sbr.rel (0) target = $region21
    $region20: #{tpu_custom_call.1} parent=1 // pred_region
      %42 = dma.done [#allocation3], 3072
    $region21: #{tpu_custom_call.1} parent=1 // pred_fallthru
      _
    // Predicated region
    $region22: #{tpu_custom_call.1} parent=1 // pred_check
      _
    $region23: #{tpu_custom_call.1} parent=1 // pred_check_branch
      %44 = sbr.rel (0) target = $region25
    $region24: #{tpu_custom_call.1} parent=1 // pred_region
      %45 = dma.done [#allocation6], 1536
    $region25: #{tpu_custom_call.1} parent=1 // pred_fallthru
      _
    %v46 = vld [vmem:[%s0] sm:$0xff]
    %v47 = vld [vmem:[%s0 + $0x8] sm:$0xff]
    %v48 = vld [vmem:[%s0 + $0x10] sm:$0xff]
    %v49 = vld [vmem:[%s0 + $0x18] sm:$0xff]
    %v50 = vld [vmem:[#allocation2] sm:$0xff]
    %v51 = vld [vmem:[#allocation2 + $0x8] sm:$0xff]
    %v52 = vld [vmem:[#allocation2 + $0x10] sm:$0xff]
    %v53 = vld [vmem:[#allocation2 + $0x18] sm:$0xff]
    %v54 = vld [vmem:[#allocation2 + $0x20] sm:$0xff]
    %v55 = vld [vmem:[#allocation2 + $0x28] sm:$0xff]
    %v56 = vld [vmem:[#allocation2 + $0x30] sm:$0xff]
    %v57 = vld [vmem:[#allocation2 + $0x38] sm:$0xff]
    %v58 = vld [vmem:[#allocation2 + $0x40] sm:$0xff]
    %v59 = vld [vmem:[#allocation2 + $0x48] sm:$0xff]
    %v60 = vld [vmem:[#allocation2 + $0x50] sm:$0xff]
    %v61 = vld [vmem:[#allocation2 + $0x58] sm:$0xff]
    %v62 = vld [vmem:[#allocation2 + $0x60] sm:$0xff]
    %v63 = vld [vmem:[#allocation2 + $0x68] sm:$0xff]
    %v64 = vld [vmem:[#allocation2 + $0x70] sm:$0xff]
    %v65 = vld [vmem:[#allocation2 + $0x78] sm:$0xff]
    %v66 = vld [vmem:[#allocation2 + $0x80] sm:$0xff]
    %v67 = vld [vmem:[#allocation2 + $0x88] sm:$0xff]
    %v68 = vld [vmem:[#allocation2 + $0x90] sm:$0xff]
    %v69 = vld [vmem:[#allocation2 + $0x98] sm:$0xff]
    %v70 = vld [vmem:[#allocation2 + $0xa0] sm:$0xff]
    %v71 = vld [vmem:[#allocation2 + $0xa8] sm:$0xff]
    %v72 = vld [vmem:[#allocation2 + $0xb0] sm:$0xff]
    %v73 = vld [vmem:[#allocation2 + $0xb8] sm:$0xff]
    %v74 = vld [vmem:[%s1] sm:$0xff]
    %v75 = vld [vmem:[%s1 + $0x8] sm:$0xff]
    %v76 = vld [vmem:[%s1 + $0x10] sm:$0xff]
    %v77 = vld [vmem:[%s1 + $0x18] sm:$0xff]
    %v78 = vld [vmem:[#allocation5] sm:$0xff]
    %v79 = vld [vmem:[#allocation5 + $0x8] sm:$0xff]
    %v80 = vld [vmem:[#allocation5 + $0x10] sm:$0xff]
    %v81 = vld [vmem:[#allocation5 + $0x18] sm:$0xff]
    %v82 = vld [vmem:[#allocation5 + $0x20] sm:$0xff]
    %v83 = vld [vmem:[#allocation5 + $0x28] sm:$0xff]
    %v84 = vld [vmem:[#allocation5 + $0x30] sm:$0xff]
    %v85 = vld [vmem:[#allocation5 + $0x38] sm:$0xff]
    %v86 = vld [vmem:[#allocation5 + $0x40] sm:$0xff]
    %v87 = vld [vmem:[#allocation5 + $0x48] sm:$0xff]
    %v88 = vld [vmem:[#allocation5 + $0x50] sm:$0xff]
    %v89 = vld [vmem:[#allocation5 + $0x58] sm:$0xff]
    %vm90 = vcmask 130048
    %v92 = vsel %vm90, %v74, 0
    %v95 = vsel %vm90, %v75, 0
    %v98 = vsel %vm90, %v76, 0
    %v101 = vsel %vm90, %v77, 0
    %103 = vmatprep.subr.mxu0 %v79
    %104 = vmatpush1.msra.mxu0 %v78
    %105 = vmatprep.subr.mxu0 %v85
    %106 = vmatpush1.msra.mxu0 %v84
    %107 = vmatprep.subr.mxu0 0.0
    %108 = vmatpush1.msra.mxu0 0.0
    %109 = vmatprep.subr.mxu0 0.0
    %110 = vmatpush1.msra.mxu0 0.0
    %111 = vmatprep.subr.mxu0 0.0
    %112 = vmatpush1.msra.mxu0 0.0
    %113 = vmatprep.subr.mxu0 0.0
    %114 = vmatpush1.msra.mxu0 0.0
    %115 = vmatprep.subr.mxu0 0.0
    %116 = vmatpush1.msra.mxu0 0.0
    %117 = vmatprep.subr.mxu0 0.0
    %118 = vmatpush1.msra.mxu0 0.0
    %119 = vmatprep.subr.mxu0 0.0
    %120 = vmatpush1.msra.mxu0 0.0
    %121 = vmatprep.subr.mxu0 0.0
    %122 = vmatpush1.msra.mxu0 0.0
    %123 = vmatprep.subr.mxu0 0.0
    %124 = vmatpush1.msra.mxu0 0.0
    %125 = vmatprep.subr.mxu0 0.0
    %126 = vmatpush1.msra.mxu0 0.0
    %127 = vmatprep.subr.mxu0 0.0
    %128 = vmatpush1.msra.mxu0 0.0
    %129 = vmatprep.subr.mxu0 0.0
    %130 = vmatpush1.msra.mxu0 0.0
    %131 = vmatprep.subr.mxu0 0.0
    %132 = vmatpush1.msra.mxu0 0.0
    %133 = vmatprep.subr.mxu0 0.0
    %134 = vmatpush1.msra.mxu0 0.0
    %135 = vmatprep.subr.mxu0 0.0
    %136 = vmatpush1.msra.mxu0 0.0
    %137 = vmatprep.subr.mxu0 0.0
    %138 = vmatpush1.msra.mxu0 0.0
    %139 = vmatprep.subr.mxu0 0.0
    %140 = vmatpush1.msra.mxu0 0.0
    %141 = vmatprep.subr.mxu0 0.0
    %142 = vmatpush1.msra.mxu0 0.0
    %143 = vmatprep.subr.mxu0 0.0
    %144 = vmatpush1.msra.mxu0 0.0
    %145 = vmatprep.subr.mxu0 0.0
    %146 = vmatpush1.msra.mxu0 0.0
    %147 = vmatprep.subr.mxu0 0.0
    %148 = vmatpush1.msra.mxu0 0.0
    %149 = vmatprep.subr.mxu0 0.0
    %150 = vmatpush1.msra.mxu0 0.0
    %151 = vmatprep.subr.mxu0 0.0
    %152 = vmatpush1.msra.mxu0 0.0
    %153 = vmatprep.subr.mxu0 0.0
    %154 = vmatpush1.msra.mxu0 0.0
    %155 = vmatprep.subr.mxu0 0.0
    %156 = vmatpush1.msra.mxu0 0.0
    %157 = vmatprep.subr.mxu0 0.0
    %158 = vmatpush1.msra.mxu0 0.0
    %159 = vmatprep.subr.mxu0 0.0
    %160 = vmatpush1.msra.mxu0 0.0
    %161 = vmatprep.subr.mxu0 0.0
    %162 = vmatpush1.msra.mxu0 0.0
    %163 = vmatprep.subr.mxu0 0.0
    %164 = vmatpush1.msra.mxu0 0.0
    %165 = vmatprep.subr.mxu0 0.0
    %166 = vmatpush1.msra.mxu0 0.0
    %167 = vmatprep.mubr.f32.mxu0 0.0
    %168 = vmatmul.mubr.f32.gmra.mrb[0].mxu0 %v92
    %v169 = vpop.f32.mrb[0].mxu0
    %v170 = vadd.f32 0.0, %v169
    %v171 = vpop.f32.mrb[0].mxu0
    %v172 = vadd.f32 0.0, %v171
    %173 = vmatprep.mubr.f32.mxu0 0.0
    %174 = vmatmul.mubr.f32.gmra.mrb[0].mxu0 %v95
    %v175 = vpop.f32.mrb[0].mxu0
    %v176 = vadd.f32 0.0, %v175
    %v177 = vpop.f32.mrb[0].mxu0
    %v178 = vadd.f32 0.0, %v177
    %179 = vmatprep.mubr.f32.mxu0 0.0
    %180 = vmatmul.mubr.f32.gmra.mrb[0].mxu0 %v98
    %v181 = vpop.f32.mrb[0].mxu0
    %v182 = vadd.f32 0.0, %v181
    %v183 = vpop.f32.mrb[0].mxu0
    %v184 = vadd.f32 0.0, %v183
    %185 = vmatprep.mubr.f32.mxu0 0.0
    %186 = vmatmul.mubr.f32.gmra.mrb[0].mxu0 %v101
    %v187 = vpop.f32.mrb[0].mxu0
    %v188 = vadd.f32 0.0, %v187
    %v189 = vpop.f32.mrb[0].mxu0
    %v190 = vadd.f32 0.0, %v189
    %191 = vdwg.mxu0
    %192 = vmatprep.subr.mxu0 %v81
    %193 = vmatpush1.msra.mxu0 %v80
    %194 = vmatprep.subr.mxu0 %v87
    %195 = vmatpush1.msra.mxu0 %v86
    %196 = vmatprep.subr.mxu0 0.0
    %197 = vmatpush1.msra.mxu0 0.0
    %198 = vmatprep.subr.mxu0 0.0
    %199 = vmatpush1.msra.mxu0 0.0
    %200 = vmatprep.subr.mxu0 0.0
    %201 = vmatpush1.msra.mxu0 0.0
    %202 = vmatprep.subr.mxu0 0.0
    %203 = vmatpush1.msra.mxu0 0.0
    %204 = vmatprep.subr.mxu0 0.0
    %205 = vmatpush1.msra.mxu0 0.0
    %206 = vmatprep.subr.mxu0 0.0
    %207 = vmatpush1.msra.mxu0 0.0
    %208 = vmatprep.subr.mxu0 0.0
    %209 = vmatpush1.msra.mxu0 0.0
    %210 = vmatprep.subr.mxu0 0.0
    %211 = vmatpush1.msra.mxu0 0.0
    %212 = vmatprep.subr.mxu0 0.0
    %213 = vmatpush1.msra.mxu0 0.0
    %214 = vmatprep.subr.mxu0 0.0
    %215 = vmatpush1.msra.mxu0 0.0
    %216 = vmatprep.subr.mxu0 0.0
    %217 = vmatpush1.msra.mxu0 0.0
    %218 = vmatprep.subr.mxu0 0.0
    %219 = vmatpush1.msra.mxu0 0.0
    %220 = vmatprep.subr.mxu0 0.0
    %221 = vmatpush1.msra.mxu0 0.0
    %222 = vmatprep.subr.mxu0 0.0
    %223 = vmatpush1.msra.mxu0 0.0
    %224 = vmatprep.subr.mxu0 0.0
    %225 = vmatpush1.msra.mxu0 0.0
    %226 = vmatprep.subr.mxu0 0.0
    %227 = vmatpush1.msra.mxu0 0.0
    %228 = vmatprep.subr.mxu0 0.0
    %229 = vmatpush1.msra.mxu0 0.0
    %230 = vmatprep.subr.mxu0 0.0
    %231 = vmatpush1.msra.mxu0 0.0
    %232 = vmatprep.subr.mxu0 0.0
    %233 = vmatpush1.msra.mxu0 0.0
    %234 = vmatprep.subr.mxu0 0.0
    %235 = vmatpush1.msra.mxu0 0.0
    %236 = vmatprep.subr.mxu0 0.0
    %237 = vmatpush1.msra.mxu0 0.0
    %238 = vmatprep.subr.mxu0 0.0
    %239 = vmatpush1.msra.mxu0 0.0
    %240 = vmatprep.subr.mxu0 0.0
    %241 = vmatpush1.msra.mxu0 0.0
    %242 = vmatprep.subr.mxu0 0.0
    %243 = vmatpush1.msra.mxu0 0.0
    %244 = vmatprep.subr.mxu0 0.0
    %245 = vmatpush1.msra.mxu0 0.0
    %246 = vmatprep.subr.mxu0 0.0
    %247 = vmatpush1.msra.mxu0 0.0
    %248 = vmatprep.subr.mxu0 0.0
    %249 = vmatpush1.msra.mxu0 0.0
    %250 = vmatprep.subr.mxu0 0.0
    %251 = vmatpush1.msra.mxu0 0.0
    %252 = vmatprep.subr.mxu0 0.0
    %253 = vmatpush1.msra.mxu0 0.0
    %254 = vmatprep.subr.mxu0 0.0
    %255 = vmatpush1.msra.mxu0 0.0
    %256 = vmatprep.mubr.f32.mxu0 0.0
    %257 = vmatmul.mubr.f32.gmra.mrb[0].mxu0 %v92
    %v258 = vpop.f32.mrb[0].mxu0
    %v259 = vadd.f32 0.0, %v258
    %v260 = vpop.f32.mrb[0].mxu0
    %v261 = vadd.f32 0.0, %v260
    %262 = vmatprep.mubr.f32.mxu0 0.0
    %263 = vmatmul.mubr.f32.gmra.mrb[0].mxu0 %v95
    %v264 = vpop.f32.mrb[0].mxu0
    %v265 = vadd.f32 0.0, %v264
    %v266 = vpop.f32.mrb[0].mxu0
    %v267 = vadd.f32 0.0, %v266
    %268 = vmatprep.mubr.f32.mxu0 0.0
    %269 = vmatmul.mubr.f32.gmra.mrb[0].mxu0 %v98
    %v270 = vpop.f32.mrb[0].mxu0
    %v271 = vadd.f32 0.0, %v270
    %v272 = vpop.f32.mrb[0].mxu0
    %v273 = vadd.f32 0.0, %v272
    %274 = vmatprep.mubr.f32.mxu0 0.0
    %275 = vmatmul.mubr.f32.gmra.mrb[0].mxu0 %v101
    %v276 = vpop.f32.mrb[0].mxu0
    %v277 = vadd.f32 0.0, %v276
    %v278 = vpop.f32.mrb[0].mxu0
    %v279 = vadd.f32 0.0, %v278
    %280 = vdwg.mxu0
    %281 = vmatprep.subr.mxu0 %v83
    %282 = vmatpush1.msra.mxu0 %v82
    %283 = vmatprep.subr.mxu0 %v89
    %284 = vmatpush1.msra.mxu0 %v88
    %285 = vmatprep.subr.mxu0 0.0
    %286 = vmatpush1.msra.mxu0 0.0
    %287 = vmatprep.subr.mxu0 0.0
    %288 = vmatpush1.msra.mxu0 0.0
    %289 = vmatprep.subr.mxu0 0.0
    %290 = vmatpush1.msra.mxu0 0.0
    %291 = vmatprep.subr.mxu0 0.0
    %292 = vmatpush1.msra.mxu0 0.0
    %293 = vmatprep.subr.mxu0 0.0
    %294 = vmatpush1.msra.mxu0 0.0
    %295 = vmatprep.subr.mxu0 0.0
    %296 = vmatpush1.msra.mxu0 0.0
    %297 = vmatprep.subr.mxu0 0.0
    %298 = vmatpush1.msra.mxu0 0.0
    %299 = vmatprep.subr.mxu0 0.0
    %300 = vmatpush1.msra.mxu0 0.0
    %301 = vmatprep.subr.mxu0 0.0
    %302 = vmatpush1.msra.mxu0 0.0
    %303 = vmatprep.subr.mxu0 0.0
    %304 = vmatpush1.msra.mxu0 0.0
    %305 = vmatprep.subr.mxu0 0.0
    %306 = vmatpush1.msra.mxu0 0.0
    %307 = vmatprep.subr.mxu0 0.0
    %308 = vmatpush1.msra.mxu0 0.0
    %309 = vmatprep.subr.mxu0 0.0
    %310 = vmatpush1.msra.mxu0 0.0
    %311 = vmatprep.subr.mxu0 0.0
    %312 = vmatpush1.msra.mxu0 0.0
    %313 = vmatprep.subr.mxu0 0.0
    %314 = vmatpush1.msra.mxu0 0.0
    %315 = vmatprep.subr.mxu0 0.0
    %316 = vmatpush1.msra.mxu0 0.0
    %317 = vmatprep.subr.mxu0 0.0
    %318 = vmatpush1.msra.mxu0 0.0
    %319 = vmatprep.subr.mxu0 0.0
    %320 = vmatpush1.msra.mxu0 0.0
    %321 = vmatprep.subr.mxu0 0.0
    %322 = vmatpush1.msra.mxu0 0.0
    %323 = vmatprep.subr.mxu0 0.0
    %324 = vmatpush1.msra.mxu0 0.0
    %325 = vmatprep.subr.mxu0 0.0
    %326 = vmatpush1.msra.mxu0 0.0
    %327 = vmatprep.subr.mxu0 0.0
    %328 = vmatpush1.msra.mxu0 0.0
    %329 = vmatprep.subr.mxu0 0.0
    %330 = vmatpush1.msra.mxu0 0.0
    %331 = vmatprep.subr.mxu0 0.0
    %332 = vmatpush1.msra.mxu0 0.0
    %333 = vmatprep.subr.mxu0 0.0
    %334 = vmatpush1.msra.mxu0 0.0
    %335 = vmatprep.subr.mxu0 0.0
    %336 = vmatpush1.msra.mxu0 0.0
    %337 = vmatprep.subr.mxu0 0.0
    %338 = vmatpush1.msra.mxu0 0.0
    %339 = vmatprep.subr.mxu0 0.0
    %340 = vmatpush1.msra.mxu0 0.0
    %341 = vmatprep.subr.mxu0 0.0
    %342 = vmatpush1.msra.mxu0 0.0
    %343 = vmatprep.subr.mxu0 0.0
    %344 = vmatpush1.msra.mxu0 0.0
    %345 = vmatprep.mubr.f32.mxu0 0.0
    %346 = vmatmul.mubr.f32.gmra.mrb[0].mxu0 %v92
    %v347 = vpop.f32.mrb[0].mxu0
    %v348 = vadd.f32 0.0, %v347
    %v349 = vpop.f32.mrb[0].mxu0
    %v350 = vadd.f32 0.0, %v349
    %351 = vmatprep.mubr.f32.mxu0 0.0
    %352 = vmatmul.mubr.f32.gmra.mrb[0].mxu0 %v95
    %v353 = vpop.f32.mrb[0].mxu0
    %v354 = vadd.f32 0.0, %v353
    %v355 = vpop.f32.mrb[0].mxu0
    %v356 = vadd.f32 0.0, %v355
    %357 = vmatprep.mubr.f32.mxu0 0.0
    %358 = vmatmul.mubr.f32.gmra.mrb[0].mxu0 %v98
    %v359 = vpop.f32.mrb[0].mxu0
    %v360 = vadd.f32 0.0, %v359
    %v361 = vpop.f32.mrb[0].mxu0
    %v362 = vadd.f32 0.0, %v361
    %363 = vmatprep.mubr.f32.mxu0 0.0
    %364 = vmatmul.mubr.f32.gmra.mrb[0].mxu0 %v101
    %v365 = vpop.f32.mrb[0].mxu0
    %v366 = vadd.f32 0.0, %v365
    %v367 = vpop.f32.mrb[0].mxu0
    %v368 = vadd.f32 0.0, %v367
    %369 = vdwg.mxu0
    %vm370 = vcmask 261120
    %v372 = vsel %vm370, %v46, 0
    %v375 = vsel %vm370, %v47, 0
    %v378 = vsel %vm370, %v48, 0
    %v381 = vsel %vm370, %v49, 0
    %383 = vmatprep.subr.mxu0 %v51
    %384 = vmatpush1.msra.mxu0 %v50
    %385 = vmatprep.subr.mxu0 %v57
    %386 = vmatpush1.msra.mxu0 %v56
    %387 = vmatprep.subr.mxu0 %v63
    %388 = vmatpush1.msra.mxu0 %v62
    %389 = vmatprep.subr.mxu0 %v69
    %390 = vmatpush1.msra.mxu0 %v68
    %391 = vmatprep.subr.mxu0 0.0
    %392 = vmatpush1.msra.mxu0 0.0
    %393 = vmatprep.subr.mxu0 0.0
    %394 = vmatpush1.msra.mxu0 0.0
    %395 = vmatprep.subr.mxu0 0.0
    %396 = vmatpush1.msra.mxu0 0.0
    %397 = vmatprep.subr.mxu0 0.0
    %398 = vmatpush1.msra.mxu0 0.0
    %399 = vmatprep.subr.mxu0 0.0
    %400 = vmatpush1.msra.mxu0 0.0
    %401 = vmatprep.subr.mxu0 0.0
    %402 = vmatpush1.msra.mxu0 0.0
    %403 = vmatprep.subr.mxu0 0.0
    %404 = vmatpush1.msra.mxu0 0.0
    %405 = vmatprep.subr.mxu0 0.0
    %406 = vmatpush1.msra.mxu0 0.0
    %407 = vmatprep.subr.mxu0 0.0
    %408 = vmatpush1.msra.mxu0 0.0
    %409 = vmatprep.subr.mxu0 0.0
    %410 = vmatpush1.msra.mxu0 0.0
    %411 = vmatprep.subr.mxu0 0.0
    %412 = vmatpush1.msra.mxu0 0.0
    %413 = vmatprep.subr.mxu0 0.0
    %414 = vmatpush1.msra.mxu0 0.0
    %415 = vmatprep.subr.mxu0 0.0
    %416 = vmatpush1.msra.mxu0 0.0
    %417 = vmatprep.subr.mxu0 0.0
    %418 = vmatpush1.msra.mxu0 0.0
    %419 = vmatprep.subr.mxu0 0.0
    %420 = vmatpush1.msra.mxu0 0.0
    %421 = vmatprep.subr.mxu0 0.0
    %422 = vmatpush1.msra.mxu0 0.0
    %423 = vmatprep.subr.mxu0 0.0
    %424 = vmatpush1.msra.mxu0 0.0
    %425 = vmatprep.subr.mxu0 0.0
    %426 = vmatpush1.msra.mxu0 0.0
    %427 = vmatprep.subr.mxu0 0.0
    %428 = vmatpush1.msra.mxu0 0.0
    %429 = vmatprep.subr.mxu0 0.0
    %430 = vmatpush1.msra.mxu0 0.0
    %431 = vmatprep.subr.mxu0 0.0
    %432 = vmatpush1.msra.mxu0 0.0
    %433 = vmatprep.subr.mxu0 0.0
    %434 = vmatpush1.msra.mxu0 0.0
    %435 = vmatprep.subr.mxu0 0.0
    %436 = vmatpush1.msra.mxu0 0.0
    %437 = vmatprep.subr.mxu0 0.0
    %438 = vmatpush1.msra.mxu0 0.0
    %439 = vmatprep.subr.mxu0 0.0
    %440 = vmatpush1.msra.mxu0 0.0
    %441 = vmatprep.subr.mxu0 0.0
    %442 = vmatpush1.msra.mxu0 0.0
    %443 = vmatprep.subr.mxu0 0.0
    %444 = vmatpush1.msra.mxu0 0.0
    %445 = vmatprep.subr.mxu0 0.0
    %446 = vmatpush1.msra.mxu0 0.0
    %447 = vmatprep.mubr.f32.mxu0 0.0
    %448 = vmatmul.mubr.f32.gmra.mrb[0].mxu0 %v372
    %v449 = vpop.f32.mrb[0].mxu0
    %v450 = vadd.f32 %v170, %v449
    %v451 = vpop.f32.mrb[0].mxu0
    %v452 = vadd.f32 %v172, %v451
    %453 = vmatprep.mubr.f32.mxu0 0.0
    %454 = vmatmul.mubr.f32.gmra.mrb[0].mxu0 %v375
    %v455 = vpop.f32.mrb[0].mxu0
    %v456 = vadd.f32 %v176, %v455
    %v457 = vpop.f32.mrb[0].mxu0
    %v458 = vadd.f32 %v178, %v457
    %459 = vmatprep.mubr.f32.mxu0 0.0
    %460 = vmatmul.mubr.f32.gmra.mrb[0].mxu0 %v378
    %v461 = vpop.f32.mrb[0].mxu0
    %v462 = vadd.f32 %v182, %v461
    %v463 = vpop.f32.mrb[0].mxu0
    %v464 = vadd.f32 %v184, %v463
    %465 = vmatprep.mubr.f32.mxu0 0.0
    %466 = vmatmul.mubr.f32.gmra.mrb[0].mxu0 %v381
    %v467 = vpop.f32.mrb[0].mxu0
    %v468 = vadd.f32 %v188, %v467
    %v469 = vpop.f32.mrb[0].mxu0
    %v470 = vadd.f32 %v190, %v469
    %471 = vdwg.mxu0
    %472 = vmatprep.subr.mxu0 %v53
    %473 = vmatpush1.msra.mxu0 %v52
    %474 = vmatprep.subr.mxu0 %v59
    %475 = vmatpush1.msra.mxu0 %v58
    %476 = vmatprep.subr.mxu0 %v65
    %477 = vmatpush1.msra.mxu0 %v64
    %478 = vmatprep.subr.mxu0 %v71
    %479 = vmatpush1.msra.mxu0 %v70
    %480 = vmatprep.subr.mxu0 0.0
    %481 = vmatpush1.msra.mxu0 0.0
    %482 = vmatprep.subr.mxu0 0.0
    %483 = vmatpush1.msra.mxu0 0.0
    %484 = vmatprep.subr.mxu0 0.0
    %485 = vmatpush1.msra.mxu0 0.0
    %486 = vmatprep.subr.mxu0 0.0
    %487 = vmatpush1.msra.mxu0 0.0
    %488 = vmatprep.subr.mxu0 0.0
    %489 = vmatpush1.msra.mxu0 0.0
    %490 = vmatprep.subr.mxu0 0.0
    %491 = vmatpush1.msra.mxu0 0.0
    %492 = vmatprep.subr.mxu0 0.0
    %493 = vmatpush1.msra.mxu0 0.0
    %494 = vmatprep.subr.mxu0 0.0
    %495 = vmatpush1.msra.mxu0 0.0
    %496 = vmatprep.subr.mxu0 0.0
    %497 = vmatpush1.msra.mxu0 0.0
    %498 = vmatprep.subr.mxu0 0.0
    %499 = vmatpush1.msra.mxu0 0.0
    %500 = vmatprep.subr.mxu0 0.0
    %501 = vmatpush1.msra.mxu0 0.0
    %502 = vmatprep.subr.mxu0 0.0
    %503 = vmatpush1.msra.mxu0 0.0
    %504 = vmatprep.subr.mxu0 0.0
    %505 = vmatpush1.msra.mxu0 0.0
    %506 = vmatprep.subr.mxu0 0.0
    %507 = vmatpush1.msra.mxu0 0.0
    %508 = vmatprep.subr.mxu0 0.0
    %509 = vmatpush1.msra.mxu0 0.0
    %510 = vmatprep.subr.mxu0 0.0
    %511 = vmatpush1.msra.mxu0 0.0
    %512 = vmatprep.subr.mxu0 0.0
    %513 = vmatpush1.msra.mxu0 0.0
    %514 = vmatprep.subr.mxu0 0.0
    %515 = vmatpush1.msra.mxu0 0.0
    %516 = vmatprep.subr.mxu0 0.0
    %517 = vmatpush1.msra.mxu0 0.0
    %518 = vmatprep.subr.mxu0 0.0
    %519 = vmatpush1.msra.mxu0 0.0
    %520 = vmatprep.subr.mxu0 0.0
    %521 = vmatpush1.msra.mxu0 0.0
    %522 = vmatprep.subr.mxu0 0.0
    %523 = vmatpush1.msra.mxu0 0.0
    %524 = vmatprep.subr.mxu0 0.0
    %525 = vmatpush1.msra.mxu0 0.0
    %526 = vmatprep.subr.mxu0 0.0
    %527 = vmatpush1.msra.mxu0 0.0
    %528 = vmatprep.subr.mxu0 0.0
    %529 = vmatpush1.msra.mxu0 0.0
    %530 = vmatprep.subr.mxu0 0.0
    %531 = vmatpush1.msra.mxu0 0.0
    %532 = vmatprep.subr.mxu0 0.0
    %533 = vmatpush1.msra.mxu0 0.0
    %534 = vmatprep.subr.mxu0 0.0
    %535 = vmatpush1.msra.mxu0 0.0
    %536 = vmatprep.mubr.f32.mxu0 0.0
    %537 = vmatmul.mubr.f32.gmra.mrb[0].mxu0 %v372
    %v538 = vpop.f32.mrb[0].mxu0
    %v539 = vadd.f32 %v259, %v538
    %v540 = vpop.f32.mrb[0].mxu0
    %v541 = vadd.f32 %v261, %v540
    %542 = vmatprep.mubr.f32.mxu0 0.0
    %543 = vmatmul.mubr.f32.gmra.mrb[0].mxu0 %v375
    %v544 = vpop.f32.mrb[0].mxu0
    %v545 = vadd.f32 %v265, %v544
    %v546 = vpop.f32.mrb[0].mxu0
    %v547 = vadd.f32 %v267, %v546
    %548 = vmatprep.mubr.f32.mxu0 0.0
    %549 = vmatmul.mubr.f32.gmra.mrb[0].mxu0 %v378
    %v550 = vpop.f32.mrb[0].mxu0
    %v551 = vadd.f32 %v271, %v550
    %v552 = vpop.f32.mrb[0].mxu0
    %v553 = vadd.f32 %v273, %v552
    %554 = vmatprep.mubr.f32.mxu0 0.0
    %555 = vmatmul.mubr.f32.gmra.mrb[0].mxu0 %v381
    %v556 = vpop.f32.mrb[0].mxu0
    %v557 = vadd.f32 %v277, %v556
    %v558 = vpop.f32.mrb[0].mxu0
    %v559 = vadd.f32 %v279, %v558
    %560 = vdwg.mxu0
    %561 = vmatprep.subr.mxu0 %v55
    %562 = vmatpush1.msra.mxu0 %v54
    %563 = vmatprep.subr.mxu0 %v61
    %564 = vmatpush1.msra.mxu0 %v60
    %565 = vmatprep.subr.mxu0 %v67
    %566 = vmatpush1.msra.mxu0 %v66
    %567 = vmatprep.subr.mxu0 %v73
    %568 = vmatpush1.msra.mxu0 %v72
    %569 = vmatprep.subr.mxu0 0.0
    %570 = vmatpush1.msra.mxu0 0.0
    %571 = vmatprep.subr.mxu0 0.0
    %572 = vmatpush1.msra.mxu0 0.0
    %573 = vmatprep.subr.mxu0 0.0
    %574 = vmatpush1.msra.mxu0 0.0
    %575 = vmatprep.subr.mxu0 0.0
    %576 = vmatpush1.msra.mxu0 0.0
    %577 = vmatprep.subr.mxu0 0.0
    %578 = vmatpush1.msra.mxu0 0.0
    %579 = vmatprep.subr.mxu0 0.0
    %580 = vmatpush1.msra.mxu0 0.0
    %581 = vmatprep.subr.mxu0 0.0
    %582 = vmatpush1.msra.mxu0 0.0
    %583 = vmatprep.subr.mxu0 0.0
    %584 = vmatpush1.msra.mxu0 0.0
    %585 = vmatprep.subr.mxu0 0.0
    %586 = vmatpush1.msra.mxu0 0.0
    %587 = vmatprep.subr.mxu0 0.0
    %588 = vmatpush1.msra.mxu0 0.0
    %589 = vmatprep.subr.mxu0 0.0
    %590 = vmatpush1.msra.mxu0 0.0
    %591 = vmatprep.subr.mxu0 0.0
    %592 = vmatpush1.msra.mxu0 0.0
    %593 = vmatprep.subr.mxu0 0.0
    %594 = vmatpush1.msra.mxu0 0.0
    %595 = vmatprep.subr.mxu0 0.0
    %596 = vmatpush1.msra.mxu0 0.0
    %597 = vmatprep.subr.mxu0 0.0
    %598 = vmatpush1.msra.mxu0 0.0
    %599 = vmatprep.subr.mxu0 0.0
    %600 = vmatpush1.msra.mxu0 0.0
    %601 = vmatprep.subr.mxu0 0.0
    %602 = vmatpush1.msra.mxu0 0.0
    %603 = vmatprep.subr.mxu0 0.0
    %604 = vmatpush1.msra.mxu0 0.0
    %605 = vmatprep.subr.mxu0 0.0
    %606 = vmatpush1.msra.mxu0 0.0
    %607 = vmatprep.subr.mxu0 0.0
    %608 = vmatpush1.msra.mxu0 0.0
    %609 = vmatprep.subr.mxu0 0.0
    %610 = vmatpush1.msra.mxu0 0.0
    %611 = vmatprep.subr.mxu0 0.0
    %612 = vmatpush1.msra.mxu0 0.0
    %613 = vmatprep.subr.mxu0 0.0
    %614 = vmatpush1.msra.mxu0 0.0
    %615 = vmatprep.subr.mxu0 0.0
    %616 = vmatpush1.msra.mxu0 0.0
    %617 = vmatprep.subr.mxu0 0.0
    %618 = vmatpush1.msra.mxu0 0.0
    %619 = vmatprep.subr.mxu0 0.0
    %620 = vmatpush1.msra.mxu0 0.0
    %621 = vmatprep.subr.mxu0 0.0
    %622 = vmatpush1.msra.mxu0 0.0
    %623 = vmatprep.subr.mxu0 0.0
    %624 = vmatpush1.msra.mxu0 0.0
    %625 = vmatprep.mubr.f32.mxu0 0.0
    %626 = vmatmul.mubr.f32.gmra.mrb[0].mxu0 %v372
    %v627 = vpop.f32.mrb[0].mxu0
    %v628 = vadd.f32 %v348, %v627
    %v629 = vpop.f32.mrb[0].mxu0
    %v630 = vadd.f32 %v350, %v629
    %631 = vmatprep.mubr.f32.mxu0 0.0
    %632 = vmatmul.mubr.f32.gmra.mrb[0].mxu0 %v375
    %v633 = vpop.f32.mrb[0].mxu0
    %v634 = vadd.f32 %v354, %v633
    %v635 = vpop.f32.mrb[0].mxu0
    %v636 = vadd.f32 %v356, %v635
    %637 = vmatprep.mubr.f32.mxu0 0.0
    %638 = vmatmul.mubr.f32.gmra.mrb[0].mxu0 %v378
    %v639 = vpop.f32.mrb[0].mxu0
    %v640 = vadd.f32 %v360, %v639
    %v641 = vpop.f32.mrb[0].mxu0
    %v642 = vadd.f32 %v362, %v641
    %643 = vmatprep.mubr.f32.mxu0 0.0
    %644 = vmatmul.mubr.f32.gmra.mrb[0].mxu0 %v381
    %v645 = vpop.f32.mrb[0].mxu0
    %v646 = vadd.f32 %v366, %v645
    %v647 = vpop.f32.mrb[0].mxu0
    %v648 = vadd.f32 %v368, %v647
    %649 = vdwg.mxu0
    %650 = vst [vmem:[#allocation7] sm:$0xff] %v450
    %651 = vst [vmem:[#allocation7 + $0x8] sm:$0xff] %v452
    %652 = vst [vmem:[#allocation7 + $0x10] sm:$0xff] %v539
    %653 = vst [vmem:[#allocation7 + $0x18] sm:$0xff] %v541
    %654 = vst [vmem:[#allocation7 + $0x20] sm:$0xff] %v628
    %655 = vst [vmem:[#allocation7 + $0x28] sm:$0xff] %v630
    %656 = vst [vmem:[#allocation7 + $0x30] sm:$0xff] %v456
    %657 = vst [vmem:[#allocation7 + $0x38] sm:$0xff] %v458
    %658 = vst [vmem:[#allocation7 + $0x40] sm:$0xff] %v545
    %659 = vst [vmem:[#allocation7 + $0x48] sm:$0xff] %v547
    %660 = vst [vmem:[#allocation7 + $0x50] sm:$0xff] %v634
    %661 = vst [vmem:[#allocation7 + $0x58] sm:$0xff] %v636
    %662 = vst [vmem:[#allocation7 + $0x60] sm:$0xff] %v462
    %663 = vst [vmem:[#allocation7 + $0x68] sm:$0xff] %v464
    %664 = vst [vmem:[#allocation7 + $0x70] sm:$0xff] %v551
    %665 = vst [vmem:[#allocation7 + $0x78] sm:$0xff] %v553
    %666 = vst [vmem:[#allocation7 + $0x80] sm:$0xff] %v640
    %667 = vst [vmem:[#allocation7 + $0x88] sm:$0xff] %v642
    %668 = vst [vmem:[#allocation7 + $0x90] sm:$0xff] %v468
    %669 = vst [vmem:[#allocation7 + $0x98] sm:$0xff] %v470
    %670 = vst [vmem:[#allocation7 + $0xa0] sm:$0xff] %v557
    %671 = vst [vmem:[#allocation7 + $0xa8] sm:$0xff] %v559
    %672 = vst [vmem:[#allocation7 + $0xb0] sm:$0xff] %v646
    %673 = vst [vmem:[#allocation7 + $0xb8] sm:$0xff] %v648
    // Predicated region
    $region26: #{tpu_custom_call.1} parent=1 // pred_check
      _
    $region27: #{tpu_custom_call.1} parent=1 // pred_check_branch
      %675 = sbr.rel (0) target = $region29
    $region28: #{tpu_custom_call.1} parent=1 // pred_region
      %s677 = ssub.s32 3072, 3072
      %678 = vsyncadd [#allocation4], %s677
      %s679 = sshll.u32 [#allocation7], 4
      %s680 = int_to_ptr.vmem [resolvable:$true] %s679
      %685 = dma.vmem_to_hbm [thread:$0]  %s680, 3072, %s4, [#allocation4], 768, 768, 48
    $region29: #{tpu_custom_call.1} parent=1 // pred_fallthru
      _
    // Predicated region
    $region30: #{tpu_custom_call.1} parent=1 // pred_check
      _
    $region31: #{tpu_custom_call.1} parent=1 // pred_check_branch
      %687 = sbr.rel (0) target = $region33
    $region32: #{tpu_custom_call.1} parent=1 // pred_region
      %688 = dma.done [#allocation4], 3072
    $region33: #{tpu_custom_call.1} parent=1 // pred_fallthru
      _
    %689 = vsyncpa [#allocation3], 1
    %690 = vsyncpa [#allocation6], 1
    %691 = vsyncpa [#allocation4], 1

</llo_original>
